<compile_context>
chip_gen: v5e
topology: v5e:2x2
jax: 0.10.0
libtpu: 0.0.40
codegen_flags: <defaults>
</compile_context>

<pallas_src>
import jax
import jax.numpy as jnp
from jax.experimental import pallas as pl
from jax.experimental.pallas import tpu as pltpu


def _copy_kernel(x_ref, o_ref):
    # Lane-dense, full-tile, unmasked copy. This body is the fusion site: a real
    # consumer would replace the RHS with its elementwise work so the HBM
    # read+write pays for itself.
    o_ref[...] = x_ref[...]


def _sublane_multiple(dtype) -> int:
    # Sub-32-bit dtypes pack along sublanes: f32 -> 8, bf16/f16 -> 16, int8/fp8 -> 32.
    return max(8, 32 // jnp.dtype(dtype).itemsize)


def _lane_dense_view(total: int, sub: int):
    """Pick a 2-D copy view (rows, lane) whose last dim is a large multiple of 128."""
    best = None
    for lane in (4096, 2048, 1024, 512, 256, 128):
        if total % lane == 0:
            rows = total // lane
            if best is None:
                best = (rows, lane)
            if rows >= sub:
                return rows, lane
    return best  # None when total is not a multiple of 128


def _tile_budget_bytes() -> int:
    # 2 MiB/buffer already reaches ~85%+ of the HBM roofline on v5e/v6e and keeps
    # double-buffered in+out (4 x tile = 8 MiB) inside every generation's default
    # scoped-VMEM limit (v5e: 16 MiB). Only bump on v7x-class chips (64 MiB
    # physical VMEM/TC, ~3.2 TB/s HBM) where the per-step overhead is visible.
    budget = 2 * 1024 * 1024
    try:
        info = pltpu.get_tpu_info()
        cap = getattr(info, "vmem_capacity_bytes", 0)
        if 0 < cap <= 64 * 1024 * 1024:
            budget = 6 * 1024 * 1024  # 4 x 6 MiB = 24 MiB < 32 MiB scoped default
    except Exception:
        pass
    return budget


def _pallas_identity_copy(x2d):
    rows, lane = x2d.shape
    dsize = jnp.dtype(x2d.dtype).itemsize
    sub = _sublane_multiple(x2d.dtype)
    budget = _tile_budget_bytes()

    # Rows per ~budget-sized tile, aligned to the dtype's sublane multiple.
    row_tile = (budget // (lane * dsize)) // sub * sub
    row_tile = max(sub, min(row_tile, rows))

    # Keep >= 4 grid steps for medium/large arrays so the prefetch of tile i+1
    # overlaps the writeback of tile i-1 (a single grid step serializes the HBM
    # read and write, halving effective copy bandwidth).
    total_bytes = rows * lane * dsize
    if total_bytes > 512 * 1024 and rows >= 4 * sub:
        row_tile = min(row_tile, max(sub, (pl.cdiv(rows, 4) // sub) * sub))

    if row_tile >= rows:
        row_tile = rows  # tiny input: one full block

    grid = (pl.cdiv(rows, row_tile),)

    return pl.pallas_call(
        _copy_kernel,
        out_shape=jax.ShapeDtypeStruct((rows, lane), x2d.dtype),
        grid_spec=pltpu.PrefetchScalarGridSpec(
            num_scalar_prefetch=0,
            grid=grid,
            in_specs=[pl.BlockSpec((row_tile, lane), lambda i: (i, 0))],
            out_specs=pl.BlockSpec((row_tile, lane), lambda i: (i, 0)),
        ),
        # No vmem_limit_bytes override: tiles are sized to fit the default
        # scoped-VMEM limit on every generation (v7x only has 64 MiB physical).
        compiler_params=pltpu.CompilerParams(
            # Enables cross-TensorCore sharding on v7x; measured no-op on v5e/v6e.
            dimension_semantics=("parallel",),
        ),
        cost_estimate=pl.CostEstimate(
            flops=0,
            transcendentals=0,
            bytes_accessed=2 * rows * lane * dsize,
        ),
    )(x2d)


def size_tracking_combine_dims(x, sizes, *, force_pallas=False):
    """Pallas equivalent of SizeTrackingCombineDims(start_dim=2, end_dim=3).forward.

    Default path: metadata-only reshape (no Pallas call, zero HBM traffic) —
    the correct implementation of a standalone flatten.
    force_pallas=True: route the data through the identity-copy kernel (only
    useful as a fusion site for neighboring elementwise work).
    """
    B, C, H, W = x.shape
    out_shape = (B, C, H * W)

    if not force_pallas:
        # flatten(2, 3) on a contiguous array is free — do no data movement.
        return x.reshape(out_shape), sizes

    total = B * C * H * W
    sub = _sublane_multiple(x.dtype)
    view = _lane_dense_view(total, sub)
    if view is None:
        # TODO(synk): totals not divisible by 128 fall back to a (B*C, H*W) view,
        # which forces masked partial stores on the last dim (slower, still correct).
        x2d = x.reshape(B * C, H * W)
    else:
        x2d = x.reshape(view)

    out2d = _pallas_identity_copy(x2d)
    out = out2d.reshape(out_shape)
    # `sizes` is returned untouched in the reference forward (pure pass-through).
    return out, sizes


if __name__ == "__main__":
    key = jax.random.PRNGKey(0)
    B, C, H, W = 2, 4, 16, 16
    x = jax.random.normal(key, (B, C, H, W), dtype=jnp.float32)
    # Per-example size metadata (ndims=4), as the module's API implies.
    sizes = jnp.tile(jnp.array([[C, H, W, 1]], dtype=jnp.int32), (B, 1))

    ref = x.reshape(B, C, H * W)

    # Default (optimized) path: no Pallas call at all.
    out_fast, sizes_fast = size_tracking_combine_dims(x, sizes)
    out_fast = jax.block_until_ready(out_fast)

    # Fusion-site path: run the Pallas identity-copy kernel once on TPU.
    out_pallas, sizes_out = size_tracking_combine_dims(x, sizes, force_pallas=True)
    out_pallas = jax.block_until_ready(out_pallas)
    sizes_out = jax.block_until_ready(sizes_out)

    assert out_fast.shape == (B, C, H * W)
    assert out_pallas.shape == (B, C, H * W)
    assert out_pallas.dtype == x.dtype
    assert jnp.array_equal(out_fast, ref)
    assert jnp.array_equal(out_pallas, ref)
    assert jnp.array_equal(sizes_fast, sizes)
    assert jnp.array_equal(sizes_out, sizes)
    print("KERNEL_OK")
</pallas_src>

<mosaic_0001>
module attributes {stable_mosaic.version = 11 : i64} {
  func.func @_copy_kernel(%arg0: i32, %arg1: memref<8x256xf32, #tpu.memory_space<vmem>>, %arg2: memref<8x256xf32, #tpu.memory_space<vmem>>) attributes {dimension_semantics = [#tpu.dimension_semantics<parallel>], iteration_bounds = array<i64: 1>, scalar_prefetch = 0 : i64, scratch_operands = 0 : i64, tpu.core_type = #tpu.core_type<tc>, window_params = [{transform_indices = @transform_0, window_bounds = array<i64: 8, 256>}, {transform_indices = @transform_1, window_bounds = array<i64: 8, 256>}]} {
    %c0 = arith.constant 0 : index
    %c0_0 = arith.constant 0 : index
    %0 = vector.load %arg1[%c0, %c0_0] : memref<8x256xf32, #tpu.memory_space<vmem>>, vector<8x256xf32>
    %c0_1 = arith.constant 0 : index
    %c0_2 = arith.constant 0 : index
    %1 = vector.load %arg2[%c0_1, %c0_2] : memref<8x256xf32, #tpu.memory_space<vmem>>, vector<8x256xf32>
    tpu.vector_store %arg2[%c0_1, %c0_2], %0 {strides = array<i32>} : memref<8x256xf32, #tpu.memory_space<vmem>>, vector<8x256xf32>,
    return
  }
  func.func @transform_0(%arg0: i32) -> (i32, i32) {
    %c0_i32 = arith.constant 0 : i32
    %c0_i32_0 = arith.constant 0 : i32
    return %arg0, %c0_i32 : i32, i32
  }
  func.func @transform_1(%arg0: i32) -> (i32, i32) {
    %c0_i32 = arith.constant 0 : i32
    %c0_i32_0 = arith.constant 0 : i32
    return %arg0, %c0_i32 : i32, i32
  }
}

</mosaic_0001>

<llo_original>
// kernel: tpu_custom_call.1
$region0: #{tpu_custom_call.1}
  #allocation0 [shape = 'u32[]', space=smem, size = 0x4, offset = 0x4, fixed_abs, tag = 'smem constant byte address 0x4 - core index']
  #allocation1 [shape = 'u32[72,128]{1,0:T(1,128)}', space=vmem, size = 0x9000, scoped, tag = 'internal scratch']
  %s0 = inlined_call_operand.hbm [shape: f32[8,256], index: 0, kind: input, shape index: {}]
  %s1 = inlined_call_operand.hbm [shape: f32[8,256], index: 1, kind: output, shape index: {}]
  %s2 = sld [smem:[#allocation0]]
  $region18: #{tpu_custom_call.1} parent=0
    _
  %s4 = ssub.s32 1, %s2
  %s5 = scalar_select 0, %s4, %s2
  $region1: #{tpu_custom_call.1} parent=0
    #allocation2 [shape = 'u8[8192]{0}', space=vmem, size = 0x2000, scoped, tag = 'input window, operand 0, single buffered']
    #allocation3 [shape = 's32[1]{0}', space=sflag, size = 0x4, scoped, tag = 'scoped memory for tpu_custom_call.1']
    #allocation4 [shape = 's32[1]{0}', space=sflag, size = 0x4, scoped, tag = 'scoped memory for tpu_custom_call.1']
    #allocation5 [shape = 'u8[8192]{0}', space=vmem, size = 0x2000, scoped, tag = 'output window, operand 0, single buffered']
    %6 = vsyncpa [#allocation3], 0
    %7 = vsyncpa [#allocation4], 0
    // Predicated region
    $region2: #{tpu_custom_call.1} parent=1 // pred_check
      _
    $region3: #{tpu_custom_call.1} parent=1 // pred_check_branch
      %9 = sbr.rel (0) target = $region5
    $region4: #{tpu_custom_call.1} parent=1 // pred_region
      %11 = vsyncadd [#allocation3], 0
      %s13 = sshll.u32 %s0, 4
      %s14 = int_to_ptr.hbm [resolvable:$true] %s13
      %s15 = sshll.u32 [#allocation2], 4
      %s16 = int_to_ptr.vmem [resolvable:$true] %s15
      %18 = dma.hbm_to_vmem [thread:$0]  %s14, 256, %s16, [#allocation3]
    $region5: #{tpu_custom_call.1} parent=1 // pred_fallthru
      _
    // Predicated region
    $region6: #{tpu_custom_call.1} parent=1 // pred_check
      _
    $region7: #{tpu_custom_call.1} parent=1 // pred_check_branch
      %20 = sbr.rel (0) target = $region9
    $region8: #{tpu_custom_call.1} parent=1 // pred_region
      %22 = dma.done [#allocation3], 256
    $region9: #{tpu_custom_call.1} parent=1 // pred_fallthru
      _
    %v23 = vld [vmem:[#allocation2] sm:$0xff]
    %v24 = vld [vmem:[#allocation2 + $0x8] sm:$0xff]
    %25 = vst [vmem:[#allocation5] sm:$0xff] %v23
    %26 = vst [vmem:[#allocation5 + $0x8] sm:$0xff] %v24
    // Predicated region
    $region10: #{tpu_custom_call.1} parent=1 // pred_check
      _
    $region11: #{tpu_custom_call.1} parent=1 // pred_check_branch
      %28 = sbr.rel (0) target = $region13
    $region12: #{tpu_custom_call.1} parent=1 // pred_region
      %30 = vsyncadd [#allocation4], 0
      %s32 = sshll.u32 [#allocation5], 4
      %s33 = int_to_ptr.vmem [resolvable:$true] %s32
      %s34 = sshll.u32 %s1, 4
      %s35 = int_to_ptr.hbm [resolvable:$true] %s34
      %37 = dma.vmem_to_hbm [thread:$0]  %s33, 256, %s35, [#allocation4]
    $region13: #{tpu_custom_call.1} parent=1 // pred_fallthru
      _
    // Predicated region
    $region14: #{tpu_custom_call.1} parent=1 // pred_check
      _
    $region15: #{tpu_custom_call.1} parent=1 // pred_check_branch
      %39 = sbr.rel (0) target = $region17
    $region16: #{tpu_custom_call.1} parent=1 // pred_region
      %41 = dma.done [#allocation4], 256
    $region17: #{tpu_custom_call.1} parent=1 // pred_fallthru
      _
    %42 = vsyncpa [#allocation3], 1
    %43 = vsyncpa [#allocation4], 1

</llo_original>
